<compile_context>
chip_gen: v7x
topology: tpu7x:2x2x1
jax: 0.10.0
libtpu: 0.0.40
codegen_flags: <defaults>
</compile_context>

<pallas_src>
import jax
import jax.numpy as jnp
import numpy as np
from jax import lax
from jax.experimental import pallas as pl
from jax.experimental.pallas import tpu as pltpu

# loss weights from EFTLoss.__init__ (no learnable parameters in this module)
KEYPOINT_LOSS_WEIGHT = 5.0
BETA_LOSS_WEIGHT = 0.001
OPENPOSE_TRAIN_WEIGHT = 0.0
GT_TRAIN_WEIGHT = 1.0
LEG_ORIENTATION_LOSS_WEIGHT = 0.005
LOSS_WEIGHT = 60.0
LENGTH_THRESHOLD = 0.0089
NUM_JOINTS = 49   # 25 openpose + 24 gt joints
NUM_BETAS = 10
LANES = 128

# Compile-time per-joint keypoint-loss weight: openpose weight for joints < 25,
# gt weight for joints 25..48, zeros at the joints the reference zeroes
# (27, 28, 39 before the leg loss; 30, 25 after it), zeros on padding lanes.
_KP_WEIGHT = np.zeros((LANES,), np.float32)
_KP_WEIGHT[:25] = OPENPOSE_TRAIN_WEIGHT
_KP_WEIGHT[25:NUM_JOINTS] = GT_TRAIN_WEIGHT
_KP_WEIGHT[[25, 27, 28, 30, 39]] = 0.0


def _eft_loss_kernel(p_ref, out_ref):
    p = p_ref[...]                                   # (8, 128) f32 -- one vreg

    gt_x, gt_y, gt_c = p[0:1, :], p[1:2, :], p[2:3, :]
    pr_x, pr_y = p[3:4, :], p[4:5, :]
    betas = p[5:6, :]
    cam0 = p[6:7, 0:1]                               # (1, 1)
    kp_w = p[7:8, :]

    # ---- leg orientation loss (get_loss_leg_orientation) ----
    def at(r, c):                                    # in-vreg (1, 1) extract
        return p[r:r + 1, c:c + 1]

    def leg(a, b):
        gdx = at(0, a) - at(0, b)
        gdy = at(1, a) - at(1, b)
        pdx = at(3, a) - at(3, b)
        pdy = at(4, a) - at(4, b)
        g_sq = gdx * gdx + gdy * gdy
        p_sq = pdx * pdx + pdy * pdy
        # rsqrt normalization instead of sqrt + divide (EUP slot, no divides)
        dot = (gdx * pdx + gdy * pdy) * lax.rsqrt(g_sq) * lax.rsqrt(p_sq)
        cond = g_sq > (LENGTH_THRESHOLD * LENGTH_THRESHOLD)
        validity = jnp.where(cond, at(2, a) * at(2, b), 0.0)
        return validity * jnp.where(cond, 1.0 - dot, 0.0)   # (1, 1)

    # left leg: joints 5+25=30, 4+25=29 ; right leg: joints 0+25=25, 1+25=26.
    # Validities use the ORIGINAL confidences (25/30 are zeroed only afterwards
    # in the reference), which row 2 still holds.
    loss_leg = (leg(30, 29) + leg(25, 26)) * LEG_ORIENTATION_LOSS_WEIGHT  # (1,1)

    # ---- keypoint MSE (projected_keypoint_loss), weight folded in ----
    dx = pr_x - gt_x
    dy = pr_y - gt_y
    loss_kp = jnp.sum(gt_c * kp_w * (dx * dx + dy * dy), axis=1, keepdims=True)
    loss_kp = loss_kp * (KEYPOINT_LOSS_WEIGHT / (NUM_JOINTS * 2.0))       # (1,1)

    # ---- beta regularizer & camera loss ----
    # padded lanes of the betas row are zero, so the lane-sum is the sum over 10
    loss_betas = jnp.sum(betas * betas, axis=1, keepdims=True) * (
        BETA_LOSS_WEIGHT / NUM_BETAS)                                     # (1,1)
    loss_cam = jnp.exp(cam0 * -20.0)                 # == exp(-10*cam[:,0])**2

    total = (loss_kp + loss_cam + loss_leg + loss_betas) * LOSS_WEIGHT    # (1,1)

    # Pack [kp, cam, leg, betas, total, 0, 0, 0] into the (1, 8) output tile
    # with in-vreg selects + one full-tile store (same cost as a lane concat,
    # proven lowering path).
    lane = lax.broadcasted_iota(jnp.int32, (1, 8), 1)
    out_ref[...] = (jnp.where(lane == 0, loss_kp, 0.0)
                    + jnp.where(lane == 1, loss_cam, 0.0)
                    + jnp.where(lane == 2, loss_leg, 0.0)
                    + jnp.where(lane == 3, loss_betas, 0.0)
                    + jnp.where(lane == 4, total, 0.0))


def _pack_inputs(pred_cam, pred_betas, pred_kp2d, gt_kp2d):
    """Pack all per-sample inputs into one lane-dense (B, 8, 128) f32 tile."""
    f32 = jnp.float32
    B = gt_kp2d.shape[0]
    gt_t = jnp.swapaxes(gt_kp2d.astype(f32), 1, 2)            # (B, 3, 49)
    pr_t = jnp.swapaxes(pred_kp2d.astype(f32), 1, 2)          # (B, 2, 49)
    kp_rows = jnp.concatenate([gt_t, pr_t], axis=1)           # (B, 5, 49)
    kp_rows = jnp.pad(kp_rows, ((0, 0), (0, 0), (0, LANES - NUM_JOINTS)))
    betas_row = jnp.pad(pred_betas.astype(f32),
                        ((0, 0), (0, LANES - pred_betas.shape[1])))[:, None, :]
    cam_row = jnp.pad(pred_cam.astype(f32),
                      ((0, 0), (0, LANES - pred_cam.shape[1])))[:, None, :]
    w_row = jnp.broadcast_to(jnp.asarray(_KP_WEIGHT), (B, 1, LANES))
    return jnp.concatenate([kp_rows, betas_row, cam_row, w_row], axis=1)  # (B,8,128)


@jax.jit
def _eft_loss_rows(pred_cam, pred_betas, pred_kp2d, gt_kp2d):
    """Per-sample loss rows: [kp, cam, leg, betas, total, 0, 0, 0]."""
    packed = _pack_inputs(pred_cam, pred_betas, pred_kp2d, gt_kp2d)  # (B, 8, 128)
    B = packed.shape[0]
    return pl.pallas_call(
        _eft_loss_kernel,
        out_shape=jax.ShapeDtypeStruct((B, 8), jnp.float32),
        grid=(B,),
        in_specs=[pl.BlockSpec((None, 8, LANES), lambda b: (b, 0, 0))],
        out_specs=pl.BlockSpec((1, 8), lambda b: (b, 0)),
        compiler_params=pltpu.CompilerParams(
            dimension_semantics=("parallel",)),
    )(packed)


def eft_loss_batched(pred, gt):
    """Per-sample EFT losses for a batch (grid over B amortizes dispatch)."""
    return _eft_loss_rows(pred['pred_cam'], pred['pred_shape'],
                          pred['smpl_joints2d'], gt['keypoints'])


def eft_loss(pred, gt):
    """JAX/Pallas equivalent of EFTLoss.forward (batch size 1, as the ref)."""
    out = eft_loss_batched(pred, gt)   # (1, 8)
    row = out[0]
    total = row[4:5]                   # shape (1,), like the torch code
    loss_dict = {
        'loss/loss_keypoints': row[0],
        'loss/loss_cam': row[1],
        'loss/loss_leg_orientation': row[2:3],   # shape (1,), like torch
        'loss/loss_regr_betas_no_reject': row[3],
        'loss/total_loss': total,
    }
    return total, loss_dict


def _reference_eft_loss(pred, gt):
    """Plain-numpy replica of the PyTorch forward (batch size 1)."""
    gt_kp = np.array(gt['keypoints'], dtype=np.float64).copy()   # (1, 49, 3)
    pred_kp = np.array(pred['smpl_joints2d'], dtype=np.float64)  # (1, 49, 2)
    betas = np.array(pred['pred_shape'], dtype=np.float64)
    cam = np.array(pred['pred_cam'], dtype=np.float64)

    gt_kp[:, 27, 2] = 0
    gt_kp[:, 28, 2] = 0
    gt_kp[:, 39, 2] = 0

    def leg(ai, bi):
        gd = gt_kp[0, ai, :2] - gt_kp[0, bi, :2]
        gl = np.linalg.norm(gd)
        if gl > LENGTH_THRESHOLD:
            gn = gd / gl
            pd = pred_kp[0, ai] - pred_kp[0, bi]
            pn = pd / np.linalg.norm(pd)
            loss = 1.0 - np.dot(gn, pn)
            valid = gt_kp[0, ai, 2] * gt_kp[0, bi, 2]
        else:
            loss, valid = 0.0, 0.0
        return valid * loss

    loss_leg = leg(30, 29) + leg(25, 26)
    gt_kp[:, 30, 2] = 0
    gt_kp[:, 25, 2] = 0

    conf = gt_kp[:, :, 2:3].copy()
    conf[:, :25] *= OPENPOSE_TRAIN_WEIGHT
    conf[:, 25:] *= GT_TRAIN_WEIGHT
    loss_kp = (conf * (pred_kp - gt_kp[:, :, :2]) ** 2).mean() * KEYPOINT_LOSS_WEIGHT
    loss_betas = (betas ** 2).mean() * BETA_LOSS_WEIGHT
    loss_cam = (np.exp(-cam[:, 0] * 10.0) ** 2).mean()
    loss_leg = loss_leg * LEG_ORIENTATION_LOSS_WEIGHT
    total = (loss_kp + loss_cam + loss_leg + loss_betas) * LOSS_WEIGHT
    return float(total)


if __name__ == "__main__":
    key = jax.random.PRNGKey(0)
    k1, k2, k3, k4, k5 = jax.random.split(key, 5)

    # ---- module-semantics check (B == 1, as the reference forward requires) ----
    B = 1
    gt_xy = jax.random.normal(k1, (B, NUM_JOINTS, 2), jnp.float32)
    gt_conf = jax.random.uniform(k2, (B, NUM_JOINTS, 1), jnp.float32)
    gt = {'keypoints': jnp.concatenate([gt_xy, gt_conf], axis=-1)}   # (1, 49, 3)
    pred = {
        'pred_cam': jax.random.normal(k3, (B, 3), jnp.float32) * 0.1,
        'pred_shape': jax.random.normal(k4, (B, NUM_BETAS), jnp.float32) * 0.1,
        'smpl_joints2d': jax.random.normal(k5, (B, NUM_JOINTS, 2), jnp.float32),
    }

    total, loss_dict = eft_loss(pred, gt)
    total = jax.block_until_ready(total)
    ref_total = _reference_eft_loss(pred, gt)
    np.testing.assert_allclose(np.asarray(total)[0], ref_total,
                               rtol=1e-4, atol=1e-4)

    # ---- batched-grid check (per-sample losses, dispatch amortized over B) ----
    B4 = 4
    kk = jax.random.split(jax.random.PRNGKey(1), 5)
    gt_xy4 = jax.random.normal(kk[0], (B4, NUM_JOINTS, 2), jnp.float32)
    gt_conf4 = jax.random.uniform(kk[1], (B4, NUM_JOINTS, 1), jnp.float32)
    gt4 = {'keypoints': jnp.concatenate([gt_xy4, gt_conf4], axis=-1)}
    pred4 = {
        'pred_cam': jax.random.normal(kk[2], (B4, 3), jnp.float32) * 0.1,
        'pred_shape': jax.random.normal(kk[3], (B4, NUM_BETAS), jnp.float32) * 0.1,
        'smpl_joints2d': jax.random.normal(kk[4], (B4, NUM_JOINTS, 2), jnp.float32),
    }
    out4 = jax.block_until_ready(eft_loss_batched(pred4, gt4))      # (4, 8)
    for i in range(B4):
        pred_i = {k: v[i:i + 1] for k, v in pred4.items()}
        gt_i = {k: v[i:i + 1] for k, v in gt4.items()}
        np.testing.assert_allclose(np.asarray(out4)[i, 4],
                                   _reference_eft_loss(pred_i, gt_i),
                                   rtol=1e-4, atol=1e-4)

    print("KERNEL_OK")
</pallas_src>

<mosaic_0001>
module attributes {stable_mosaic.version = 11 : i64} {
  func.func @_eft_loss_kernel(%arg0: i32, %arg1: memref<1x8x128xf32, #tpu.memory_space<vmem>>, %arg2: memref<1x8xf32, #tpu.memory_space<vmem>>) attributes {dimension_semantics = [#tpu.dimension_semantics<parallel>], iteration_bounds = array<i64: 1>, scalar_prefetch = 0 : i64, scratch_operands = 0 : i64, tpu.core_type = #tpu.core_type<tc>, window_params = [{transform_indices = @transform_0, window_bounds = array<i64: 1, 8, 128>}, {transform_indices = @transform_1, window_bounds = array<i64: 1, 8>}]} {
    %c0 = arith.constant 0 : index
    %c0_0 = arith.constant 0 : index
    %c0_1 = arith.constant 0 : index
    %0 = vector.load %arg1[%c0, %c0_0, %c0_1] : memref<1x8x128xf32, #tpu.memory_space<vmem>>, vector<1x8x128xf32>
    %1 = vector.shape_cast %0 : vector<1x8x128xf32> to vector<8x128xf32>
    %2 = vector.extract_strided_slice %1 {offsets = [0, 0], sizes = [1, 128], strides = [1, 1]} : vector<8x128xf32> to vector<1x128xf32>
    %3 = vector.extract_strided_slice %1 {offsets = [1, 0], sizes = [1, 128], strides = [1, 1]} : vector<8x128xf32> to vector<1x128xf32>
    %4 = vector.extract_strided_slice %1 {offsets = [2, 0], sizes = [1, 128], strides = [1, 1]} : vector<8x128xf32> to vector<1x128xf32>
    %5 = vector.extract_strided_slice %1 {offsets = [3, 0], sizes = [1, 128], strides = [1, 1]} : vector<8x128xf32> to vector<1x128xf32>
    %6 = vector.extract_strided_slice %1 {offsets = [4, 0], sizes = [1, 128], strides = [1, 1]} : vector<8x128xf32> to vector<1x128xf32>
    %7 = vector.extract_strided_slice %1 {offsets = [5, 0], sizes = [1, 128], strides = [1, 1]} : vector<8x128xf32> to vector<1x128xf32>
    %8 = vector.extract_strided_slice %1 {offsets = [6, 0], sizes = [1, 1], strides = [1, 1]} : vector<8x128xf32> to vector<1x1xf32>
    %9 = vector.extract_strided_slice %1 {offsets = [7, 0], sizes = [1, 128], strides = [1, 1]} : vector<8x128xf32> to vector<1x128xf32>
    %10 = vector.extract_strided_slice %1 {offsets = [0, 30], sizes = [1, 1], strides = [1, 1]} : vector<8x128xf32> to vector<1x1xf32>
    %11 = vector.extract_strided_slice %1 {offsets = [0, 29], sizes = [1, 1], strides = [1, 1]} : vector<8x128xf32> to vector<1x1xf32>
    %12 = arith.subf %10, %11 : vector<1x1xf32>
    %13 = vector.extract_strided_slice %1 {offsets = [1, 30], sizes = [1, 1], strides = [1, 1]} : vector<8x128xf32> to vector<1x1xf32>
    %14 = vector.extract_strided_slice %1 {offsets = [1, 29], sizes = [1, 1], strides = [1, 1]} : vector<8x128xf32> to vector<1x1xf32>
    %15 = arith.subf %13, %14 : vector<1x1xf32>
    %16 = vector.extract_strided_slice %1 {offsets = [3, 30], sizes = [1, 1], strides = [1, 1]} : vector<8x128xf32> to vector<1x1xf32>
    %17 = vector.extract_strided_slice %1 {offsets = [3, 29], sizes = [1, 1], strides = [1, 1]} : vector<8x128xf32> to vector<1x1xf32>
    %18 = arith.subf %16, %17 : vector<1x1xf32>
    %19 = vector.extract_strided_slice %1 {offsets = [4, 30], sizes = [1, 1], strides = [1, 1]} : vector<8x128xf32> to vector<1x1xf32>
    %20 = vector.extract_strided_slice %1 {offsets = [4, 29], sizes = [1, 1], strides = [1, 1]} : vector<8x128xf32> to vector<1x1xf32>
    %21 = arith.subf %19, %20 : vector<1x1xf32>
    %22 = arith.mulf %12, %12 : vector<1x1xf32>
    %23 = arith.mulf %15, %15 : vector<1x1xf32>
    %24 = arith.addf %22, %23 : vector<1x1xf32>
    %25 = arith.mulf %18, %18 : vector<1x1xf32>
    %26 = arith.mulf %21, %21 : vector<1x1xf32>
    %27 = arith.addf %25, %26 : vector<1x1xf32>
    %28 = arith.mulf %12, %18 : vector<1x1xf32>
    %29 = arith.mulf %15, %21 : vector<1x1xf32>
    %30 = arith.addf %28, %29 : vector<1x1xf32>
    %31 = math.rsqrt %24 : vector<1x1xf32>
    %32 = arith.mulf %30, %31 : vector<1x1xf32>
    %33 = math.rsqrt %27 : vector<1x1xf32>
    %34 = arith.mulf %32, %33 : vector<1x1xf32>
    %cst = arith.constant 7.921000e-05 : f32
    %35 = vector.broadcast %cst : f32 to vector<1x1xf32>
    %36 = arith.cmpf ogt, %24, %35 : vector<1x1xf32>
    %37 = vector.extract_strided_slice %1 {offsets = [2, 30], sizes = [1, 1], strides = [1, 1]} : vector<8x128xf32> to vector<1x1xf32>
    %38 = vector.extract_strided_slice %1 {offsets = [2, 29], sizes = [1, 1], strides = [1, 1]} : vector<8x128xf32> to vector<1x1xf32>
    %39 = arith.mulf %37, %38 : vector<1x1xf32>
    %cst_2 = arith.constant 0.000000e+00 : f32
    %40 = vector.broadcast %cst_2 : f32 to vector<1x1xf32>
    %41 = arith.select %36, %39, %40 : vector<1x1xi1>, vector<1x1xf32>
    %cst_3 = arith.constant 1.000000e+00 : f32
    %42 = vector.broadcast %cst_3 : f32 to vector<1x1xf32>
    %43 = arith.subf %42, %34 : vector<1x1xf32>
    %cst_4 = arith.constant 0.000000e+00 : f32
    %44 = vector.broadcast %cst_4 : f32 to vector<1x1xf32>
    %45 = arith.select %36, %43, %44 : vector<1x1xi1>, vector<1x1xf32>
    %46 = arith.mulf %41, %45 : vector<1x1xf32>
    %47 = vector.extract_strided_slice %1 {offsets = [0, 25], sizes = [1, 1], strides = [1, 1]} : vector<8x128xf32> to vector<1x1xf32>
    %48 = vector.extract_strided_slice %1 {offsets = [0, 26], sizes = [1, 1], strides = [1, 1]} : vector<8x128xf32> to vector<1x1xf32>
    %49 = arith.subf %47, %48 : vector<1x1xf32>
    %50 = vector.extract_strided_slice %1 {offsets = [1, 25], sizes = [1, 1], strides = [1, 1]} : vector<8x128xf32> to vector<1x1xf32>
    %51 = vector.extract_strided_slice %1 {offsets = [1, 26], sizes = [1, 1], strides = [1, 1]} : vector<8x128xf32> to vector<1x1xf32>
    %52 = arith.subf %50, %51 : vector<1x1xf32>
    %53 = vector.extract_strided_slice %1 {offsets = [3, 25], sizes = [1, 1], strides = [1, 1]} : vector<8x128xf32> to vector<1x1xf32>
    %54 = vector.extract_strided_slice %1 {offsets = [3, 26], sizes = [1, 1], strides = [1, 1]} : vector<8x128xf32> to vector<1x1xf32>
    %55 = arith.subf %53, %54 : vector<1x1xf32>
    %56 = vector.extract_strided_slice %1 {offsets = [4, 25], sizes = [1, 1], strides = [1, 1]} : vector<8x128xf32> to vector<1x1xf32>
    %57 = vector.extract_strided_slice %1 {offsets = [4, 26], sizes = [1, 1], strides = [1, 1]} : vector<8x128xf32> to vector<1x1xf32>
    %58 = arith.subf %56, %57 : vector<1x1xf32>
    %59 = arith.mulf %49, %49 : vector<1x1xf32>
    %60 = arith.mulf %52, %52 : vector<1x1xf32>
    %61 = arith.addf %59, %60 : vector<1x1xf32>
    %62 = arith.mulf %55, %55 : vector<1x1xf32>
    %63 = arith.mulf %58, %58 : vector<1x1xf32>
    %64 = arith.addf %62, %63 : vector<1x1xf32>
    %65 = arith.mulf %49, %55 : vector<1x1xf32>
    %66 = arith.mulf %52, %58 : vector<1x1xf32>
    %67 = arith.addf %65, %66 : vector<1x1xf32>
    %68 = math.rsqrt %61 : vector<1x1xf32>
    %69 = arith.mulf %67, %68 : vector<1x1xf32>
    %70 = math.rsqrt %64 : vector<1x1xf32>
    %71 = arith.mulf %69, %70 : vector<1x1xf32>
    %cst_5 = arith.constant 7.921000e-05 : f32
    %72 = vector.broadcast %cst_5 : f32 to vector<1x1xf32>
    %73 = arith.cmpf ogt, %61, %72 : vector<1x1xf32>
    %74 = vector.extract_strided_slice %1 {offsets = [2, 25], sizes = [1, 1], strides = [1, 1]} : vector<8x128xf32> to vector<1x1xf32>
    %75 = vector.extract_strided_slice %1 {offsets = [2, 26], sizes = [1, 1], strides = [1, 1]} : vector<8x128xf32> to vector<1x1xf32>
    %76 = arith.mulf %74, %75 : vector<1x1xf32>
    %cst_6 = arith.constant 0.000000e+00 : f32
    %77 = vector.broadcast %cst_6 : f32 to vector<1x1xf32>
    %78 = arith.select %73, %76, %77 : vector<1x1xi1>, vector<1x1xf32>
    %cst_7 = arith.constant 1.000000e+00 : f32
    %79 = vector.broadcast %cst_7 : f32 to vector<1x1xf32>
    %80 = arith.subf %79, %71 : vector<1x1xf32>
    %cst_8 = arith.constant 0.000000e+00 : f32
    %81 = vector.broadcast %cst_8 : f32 to vector<1x1xf32>
    %82 = arith.select %73, %80, %81 : vector<1x1xi1>, vector<1x1xf32>
    %83 = arith.mulf %78, %82 : vector<1x1xf32>
    %84 = arith.addf %46, %83 : vector<1x1xf32>
    %cst_9 = arith.constant 5.000000e-03 : f32
    %85 = vector.broadcast %cst_9 : f32 to vector<1x1xf32>
    %86 = arith.mulf %84, %85 : vector<1x1xf32>
    %87 = arith.subf %5, %2 : vector<1x128xf32>
    %88 = arith.subf %6, %3 : vector<1x128xf32>
    %89 = arith.mulf %4, %9 : vector<1x128xf32>
    %90 = arith.mulf %87, %87 : vector<1x128xf32>
    %91 = arith.mulf %88, %88 : vector<1x128xf32>
    %92 = arith.addf %90, %91 : vector<1x128xf32>
    %93 = arith.mulf %89, %92 : vector<1x128xf32>
    %cst_10 = arith.constant dense<0.000000e+00> : vector<1xf32>
    %94 = vector.multi_reduction <add>, %93, %cst_10 [1] : vector<1x128xf32> to vector<1xf32>
    %95 = vector.shape_cast %94 : vector<1xf32> to vector<1x1xf32>
    %cst_11 = arith.constant 0.0510204099 : f32
    %96 = vector.broadcast %cst_11 : f32 to vector<1x1xf32>
    %97 = arith.mulf %95, %96 : vector<1x1xf32>
    %98 = arith.mulf %7, %7 : vector<1x128xf32>
    %cst_12 = arith.constant dense<0.000000e+00> : vector<1xf32>
    %99 = vector.multi_reduction <add>, %98, %cst_12 [1] : vector<1x128xf32> to vector<1xf32>
    %100 = vector.shape_cast %99 : vector<1xf32> to vector<1x1xf32>
    %cst_13 = arith.constant 9.99999974E-5 : f32
    %101 = vector.broadcast %cst_13 : f32 to vector<1x1xf32>
    %102 = arith.mulf %100, %101 : vector<1x1xf32>
    %cst_14 = arith.constant -2.000000e+01 : f32
    %103 = vector.broadcast %cst_14 : f32 to vector<1x1xf32>
    %104 = arith.mulf %8, %103 : vector<1x1xf32>
    %105 = math.exp %104 : vector<1x1xf32>
    %106 = arith.addf %97, %105 : vector<1x1xf32>
    %107 = arith.addf %106, %86 : vector<1x1xf32>
    %108 = arith.addf %107, %102 : vector<1x1xf32>
    %cst_15 = arith.constant 6.000000e+01 : f32
    %109 = vector.broadcast %cst_15 : f32 to vector<1x1xf32>
    %110 = arith.mulf %108, %109 : vector<1x1xf32>
    %111 = tpu.iota {dimensions = array<i32: 1>} : vector<1x8xi32>
    %c0_i32 = arith.constant 0 : i32
    %112 = vector.broadcast %c0_i32 : i32 to vector<1x8xi32>
    %113 = arith.cmpi eq, %111, %112 : vector<1x8xi32>
    %cst_16 = arith.constant 0.000000e+00 : f32
    %114 = vector.shape_cast %97 : vector<1x1xf32> to vector<1x1xf32>
    %115 = vector.broadcast %114 : vector<1x1xf32> to vector<1x8xf32>
    %116 = vector.broadcast %cst_16 : f32 to vector<1x8xf32>
    %117 = arith.select %113, %115, %116 : vector<1x8xi1>, vector<1x8xf32>
    %c1_i32 = arith.constant 1 : i32
    %118 = vector.broadcast %c1_i32 : i32 to vector<1x8xi32>
    %119 = arith.cmpi eq, %111, %118 : vector<1x8xi32>
    %cst_17 = arith.constant 0.000000e+00 : f32
    %120 = vector.shape_cast %105 : vector<1x1xf32> to vector<1x1xf32>
    %121 = vector.broadcast %120 : vector<1x1xf32> to vector<1x8xf32>
    %122 = vector.broadcast %cst_17 : f32 to vector<1x8xf32>
    %123 = arith.select %119, %121, %122 : vector<1x8xi1>, vector<1x8xf32>
    %124 = arith.addf %117, %123 : vector<1x8xf32>
    %c2_i32 = arith.constant 2 : i32
    %125 = vector.broadcast %c2_i32 : i32 to vector<1x8xi32>
    %126 = arith.cmpi eq, %111, %125 : vector<1x8xi32>
    %cst_18 = arith.constant 0.000000e+00 : f32
    %127 = vector.shape_cast %86 : vector<1x1xf32> to vector<1x1xf32>
    %128 = vector.broadcast %127 : vector<1x1xf32> to vector<1x8xf32>
    %129 = vector.broadcast %cst_18 : f32 to vector<1x8xf32>
    %130 = arith.select %126, %128, %129 : vector<1x8xi1>, vector<1x8xf32>
    %131 = arith.addf %124, %130 : vector<1x8xf32>
    %c3_i32 = arith.constant 3 : i32
    %132 = vector.broadcast %c3_i32 : i32 to vector<1x8xi32>
    %133 = arith.cmpi eq, %111, %132 : vector<1x8xi32>
    %cst_19 = arith.constant 0.000000e+00 : f32
    %134 = vector.shape_cast %102 : vector<1x1xf32> to vector<1x1xf32>
    %135 = vector.broadcast %134 : vector<1x1xf32> to vector<1x8xf32>
    %136 = vector.broadcast %cst_19 : f32 to vector<1x8xf32>
    %137 = arith.select %133, %135, %136 : vector<1x8xi1>, vector<1x8xf32>
    %138 = arith.addf %131, %137 : vector<1x8xf32>
    %c4_i32 = arith.constant 4 : i32
    %139 = vector.broadcast %c4_i32 : i32 to vector<1x8xi32>
    %140 = arith.cmpi eq, %111, %139 : vector<1x8xi32>
    %cst_20 = arith.constant 0.000000e+00 : f32
    %141 = vector.shape_cast %110 : vector<1x1xf32> to vector<1x1xf32>
    %142 = vector.broadcast %141 : vector<1x1xf32> to vector<1x8xf32>
    %143 = vector.broadcast %cst_20 : f32 to vector<1x8xf32>
    %144 = arith.select %140, %142, %143 : vector<1x8xi1>, vector<1x8xf32>
    %145 = arith.addf %138, %144 : vector<1x8xf32>
    %c0_21 = arith.constant 0 : index
    %c0_22 = arith.constant 0 : index
    %146 = vector.load %arg2[%c0_21, %c0_22] : memref<1x8xf32, #tpu.memory_space<vmem>>, vector<1x8xf32>
    tpu.vector_store %arg2[%c0_21, %c0_22], %145 {strides = array<i32>} : memref<1x8xf32, #tpu.memory_space<vmem>>, vector<1x8xf32>,
    return
  }
  func.func @transform_0(%arg0: i32) -> (i32, i32, i32) {
    %c0_i32 = arith.constant 0 : i32
    %c0_i32_0 = arith.constant 0 : i32
    %c0_i32_1 = arith.constant 0 : i32
    return %arg0, %c0_i32, %c0_i32_0 : i32, i32, i32
  }
  func.func @transform_1(%arg0: i32) -> (i32, i32) {
    %c0_i32 = arith.constant 0 : i32
    %c0_i32_0 = arith.constant 0 : i32
    return %arg0, %c0_i32 : i32, i32
  }
}

</mosaic_0001>

<llo_original>
// kernel: _eft_loss_rows.1
$region0: #{_eft_loss_rows.1}
  #allocation0 [shape = 'u32[]', space=smem, size = 0x4, offset = 0x4, fixed_abs, tag = 'smem constant byte address 0x4 - core index']
  #allocation1 [shape = 'u32[144,128]{1,0:T(1,128)}', space=vmem, size = 0x12000, scoped, tag = 'internal scratch']
  %s0 = inlined_call_operand.vmem [shape: f32[1,8,128], index: 0, kind: input, shape index: {}]
  %s1 = inlined_call_operand.hbm [shape: f32[1,8], index: 1, kind: output, shape index: {}]
  %s2 = sld [smem:[#allocation0]]
  $region14: #{_eft_loss_rows.1} parent=0
    _
  %s4 = ssub.s32 1, %s2
  %s5 = scalar_select 0, %s4, %s2
  $region1: #{_eft_loss_rows.1} parent=0
    #allocation2 [shape = 'u8[512]{0}', space=vmem, size = 0x400, scoped, tag = 'output window, operand 0, single buffered']
    #allocation3 [shape = 's32[1]{0}', space=sflag, size = 0x4, scoped, tag = 'scoped memory for _eft_loss_rows.1']
    %6 = vsyncpa [#allocation3], 0
    // Predicated region
    $region2: #{_eft_loss_rows.1} parent=1 // pred_check
      _
    $region3: #{_eft_loss_rows.1} parent=1 // pred_check_branch
      %8 = sbr.rel (0) target = $region5
    $region4: #{_eft_loss_rows.1} parent=1 // pred_region
      _
    $region5: #{_eft_loss_rows.1} parent=1 // pred_fallthru
      _
    %v9 = vld [vmem:[%s0] sm:$0xff]
    %11 = vrot.lane.b32.xlu0 %v9, 1
    %v12 = vpop.permute.xlu0 %11
    %v14 = vsub.f32 %v9, %v12
    %v15 = vmul.f32 %v14, %v14
    %v17 = vrot.slane %v15, 1
    %v19 = vadd.f32 %v15, %v17
    %v21 = vrot.slane %v14, 3
    %v23 = vmul.f32 %v14, %v21
    %v25 = vrot.slane %v23, 1
    %v27 = vadd.f32 %v23, %v25
    %v28 = vrsqrt.pop %v19
    %v29 = vmul.f32 %v27, %v28
    %v31 = vrot.slane %v28, 3
    %v33 = vmul.f32 %v29, %v31
    %vm34 = vcmp.gt.f32.partialorder %v19, 7.921e-05
    %v35 = vmul.f32 %v9, %v12
    %v37 = vrot.slane %v35, 2
    %v39 = vsel %vm34, %v37, 0.0
    %v40 = vsub.f32 1.0, %v33
    %v41 = vsel %vm34, %v40, 0.0
    %v42 = vmul.f32 %v39, %v41
    %43 = vrot.lane.b32.xlu0 %v9, 127
    %v44 = vpop.permute.xlu0 %43
    %v46 = vsub.f32 %v9, %v44
    %v47 = vmul.f32 %v46, %v46
    %v49 = vrot.slane %v47, 1
    %v51 = vadd.f32 %v47, %v49
    %v53 = vrot.slane %v46, 3
    %v55 = vmul.f32 %v46, %v53
    %v57 = vrot.slane %v55, 1
    %v59 = vadd.f32 %v55, %v57
    %v60 = vrsqrt.pop %v51
    %v61 = vmul.f32 %v59, %v60
    %v63 = vrot.slane %v60, 3
    %v65 = vmul.f32 %v61, %v63
    %vm66 = vcmp.gt.f32.partialorder %v51, 7.921e-05
    %v67 = vmul.f32 %v9, %v44
    %v69 = vrot.slane %v67, 2
    %v71 = vsel %vm66, %v69, 0.0
    %v72 = vsub.f32 1.0, %v65
    %v73 = vsel %vm66, %v72, 0.0
    %v74 = vmul.f32 %v71, %v73
    %76 = vrot.lane.b32.xlu0 %v74, 5
    %v77 = vpop.permute.xlu0 %76
    %v79 = vadd.f32 %v42, %v77
    %v80 = vmul.f32 %v79, 0.005
    %v81 = vrot.slane %v9, 5
    %v83 = vsub.f32 %v9, %v81
    %v84 = vmul.f32 %v9, %v81
    %v85 = vmul.f32 %v83, %v83
    %v87 = vrot.slane %v85, 1
    %v89 = vadd.f32 %v85, %v87
    %v91 = vrot.slane %v89, 1
    %v93 = vmul.f32 %v84, %v91
    %vm94 = vcmask 1042434
    %v95 = vsel %vm94, %v93, 0.0
    %96 = vadd.xlane.f32.xlu0 %v95
    %v97 = vpop.xlane.xlu0 %96
    %v98 = vmul.f32 %v97, 0.05102041
    %v99 = vmul.f32 %v9, %v9
    %vm100 = vcmask 1045509
    %v101 = vsel %vm100, %v99, 0.0
    %102 = vadd.xlane.f32.xlu0 %v101
    %v103 = vpop.xlane.xlu0 %102
    %v104 = vmul.f32 %v103, 0.0001
    %v105 = vmul.f32 %v9, -20.0
    %v106 = vmul.f32 %v105, 1.442695
    %v107 = vpow.pop %v106
    %v109 = vrot.slane %v107, 4
    %v111 = vadd.f32 %v98, %v109
    %v113 = vrot.slane %v80, 6
    %114 = vrot.lane.b32.xlu0 %v113, 98
    %v115 = vpop.permute.xlu0 %114
    %v117 = vadd.f32 %v111, %v115
    %v119 = vrot.slane %v104, 3
    %v121 = vadd.f32 %v117, %v119
    %v122 = vmul.f32 %v121, 60.0
    %v123 = vlaneseq
    %v124 = vand.u32 %v123, 127
    %vm125 = vcmp.eq.s32.totalorder %v124, 0
    %v126 = vsel %vm125, %v98, 0.0
    %vm127 = vcmp.eq.s32.totalorder %v124, 1
    %128 = vset.pattern.permute.xlu0 0
    %129 = vperm.xlu0 %128, %v107
    %v130 = vpop.permute.xlu0 %129
    %v132 = vsel %vm127, %v130, 0.0
    %v134 = vrot.slane %v132, 4
    %v136 = vadd.f32 %v126, %v134
    %vm137 = vcmp.eq.s32.totalorder %v124, 2
    %138 = vset.pattern.permute.xlu0 30
    %139 = vperm.xlu0 %138, %v80
    %v140 = vpop.permute.xlu0 %139
    %v142 = vsel %vm137, %v140, 0.0
    %v144 = vrot.slane %v142, 6
    %v146 = vadd.f32 %v136, %v144
    %vm147 = vcmp.eq.s32.totalorder %v124, 3
    %v148 = vsel %vm147, %v104, 0.0
    %v150 = vrot.slane %v148, 3
    %v152 = vadd.f32 %v146, %v150
    %vm153 = vcmp.eq.s32.totalorder %v124, 4
    %155 = vset.pattern.permute.xlu0 0
    %156 = vperm.xlu0 %155, %v122
    %v157 = vpop.permute.xlu0 %156
    %v159 = vsel %vm153, %v157, 0.0
    %v160 = vadd.f32 %v152, %v159
    %vm161 = vcmask 59394
    %162 = vst.msk [vmem:[#allocation2 - $0x2] sm:$0x4] %vm161, %v160
    // Predicated region
    $region6: #{_eft_loss_rows.1} parent=1 // pred_check
      _
    $region7: #{_eft_loss_rows.1} parent=1 // pred_check_branch
      %164 = sbr.rel (0) target = $region9
    $region8: #{_eft_loss_rows.1} parent=1 // pred_region
      %s166 = ssub.s32 16, 16
      %167 = vsyncadd [#allocation3], %s166
      %s169 = sshll.u32 [#allocation2], 4
      %s170 = int_to_ptr.vmem [resolvable:$true] %s169
      %172 = dma.vmem_to_hbm [thread:$0]  %s170, 16, %s1, [#allocation3]
    $region9: #{_eft_loss_rows.1} parent=1 // pred_fallthru
      _
    // Predicated region
    $region10: #{_eft_loss_rows.1} parent=1 // pred_check
      _
    $region11: #{_eft_loss_rows.1} parent=1 // pred_check_branch
      %174 = sbr.rel (0) target = $region13
    $region12: #{_eft_loss_rows.1} parent=1 // pred_region
      %175 = dma.done [#allocation3], 16
    $region13: #{_eft_loss_rows.1} parent=1 // pred_fallthru
      _
    %176 = vsyncpa [#allocation3], 1

</llo_original>
